<compile_context>
chip_gen: v5e
topology: v5e:2x2
jax: 0.10.0
libtpu: 0.0.40
codegen_flags: <defaults>
</compile_context>

<pallas_src>
import functools

import jax
import jax.numpy as jnp
from jax.experimental import pallas as pl
from jax.experimental.pallas import tpu as pltpu


def _round_up(x, m):
    return ((x + m - 1) // m) * m


def _dec_kernel(s_ref, p_ref,
                w1s_ref, w1p_ref, b1_ref,
                w2_ref, b2_ref,
                w3_ref, b3_ref,
                w4_ref, b4_ref,
                o_ref):
    # Activations arrive as f32; cast to bf16 only right before each dot.
    s = s_ref[...].astype(jnp.bfloat16)
    p = p_ref[...].astype(jnp.bfloat16)

    # de1 (concat fused via split weight) -> relu -> (dropout = identity)
    h = (jnp.dot(s, w1s_ref[...], preferred_element_type=jnp.float32)
         + jnp.dot(p, w1p_ref[...], preferred_element_type=jnp.float32)
         + b1_ref[...])
    h = jnp.maximum(h, 0.0)

    # de2 -> relu -> (dropout = identity)
    h = jnp.dot(h.astype(jnp.bfloat16), w2_ref[...],
                preferred_element_type=jnp.float32) + b2_ref[...]
    h = jnp.maximum(h, 0.0)

    # de3 -> relu -> (dropout = identity)
    h = jnp.dot(h.astype(jnp.bfloat16), w3_ref[...],
                preferred_element_type=jnp.float32) + b3_ref[...]
    h = jnp.maximum(h, 0.0)

    # de4 (output layer; unpadded width -> masked vst, store slot has slack)
    h = jnp.dot(h.astype(jnp.bfloat16), w4_ref[...],
                preferred_element_type=jnp.float32) + b4_ref[...]
    o_ref[...] = h.astype(o_ref.dtype)


@functools.partial(jax.jit, static_argnames=("block_batch",))
def dec_model_forward(s, p, params, *, block_batch=2048):
    """s: [B, z_dim] f32, p: [B, c_dim] f32; returns [B, i_shape] f32."""
    B, z_dim = s.shape
    c_dim = p.shape[1]
    mid = params["w1"].shape[1]
    i_shape = params["w4"].shape[1]

    # Weights in bf16 (no-op if already bf16); biases stay f32.
    w1 = params["w1"].astype(jnp.bfloat16)
    w1s, w1p = w1[:z_dim], w1[z_dim:]          # static split: fuses the concat
    w2 = params["w2"].astype(jnp.bfloat16)
    w3 = params["w3"].astype(jnp.bfloat16)
    w4 = params["w4"].astype(jnp.bfloat16)
    b1 = params["b1"].astype(jnp.float32)
    b2 = params["b2"].astype(jnp.float32)
    b3 = params["b3"].astype(jnp.float32)
    b4 = params["b4"].astype(jnp.float32)

    # Batch tile: multiple of 8 sublanes, as large as block_batch allows.
    tb = min(block_batch, _round_up(B, 8))
    # Prefer >=2 grid steps so v7x's two TensorCores both get work.
    if tb > 8 and pl.cdiv(B, tb) < 2:
        tb = min(tb, _round_up(pl.cdiv(B, 2), 8))
    grid = (pl.cdiv(B, tb),)                   # remainder tile handled by Pallas

    def act_spec(feat):
        return pl.BlockSpec((tb, feat), lambda i: (i, 0))

    def resident(shape):
        # Same block index every grid step -> stays resident in VMEM.
        return pl.BlockSpec(shape, lambda i: (0, 0))

    in_specs = [
        act_spec(z_dim),                  # s (f32)
        act_spec(c_dim),                  # p (f32)
        resident(w1s.shape), resident(w1p.shape), resident(b1.shape),
        resident(w2.shape), resident(b2.shape),
        resident(w3.shape), resident(b3.shape),
        resident(w4.shape), resident(b4.shape),
    ]
    out_specs = pl.BlockSpec((tb, i_shape), lambda i: (i, 0))

    flops = 2 * B * ((z_dim + c_dim) * mid + 2 * mid * mid + mid * i_shape)
    bytes_accessed = (
        (s.size + p.size) * 4                                        # f32 acts
        + (w1s.size + w1p.size + w2.size + w3.size + w4.size) * 2    # bf16 wts
        + (b1.size + b2.size + b3.size + b4.size) * 4                # f32 bias
        + B * i_shape * 4                                            # f32 out
    )

    return pl.pallas_call(
        _dec_kernel,
        out_shape=jax.ShapeDtypeStruct((B, i_shape), jnp.float32),
        grid=grid,
        in_specs=in_specs,
        out_specs=out_specs,
        compiler_params=pltpu.CompilerParams(
            dimension_semantics=("parallel",),
            vmem_limit_bytes=32 * 1024 * 1024,
        ),
        cost_estimate=pl.CostEstimate(
            flops=flops, transcendentals=0, bytes_accessed=bytes_accessed),
    )(s, p, w1s, w1p, b1, w2, b2, w3, b3, w4, b4)


def init_params(key, z_dim, c_dim, mid_shape, i_shape):
    """Deterministic init mimicking nn.Linear default (uniform +-1/sqrt(fan_in)).
    Weights stored as (in, out), bf16; biases (1, out), f32."""
    dims = [(z_dim + c_dim, mid_shape),
            (mid_shape, mid_shape),
            (mid_shape, mid_shape),
            (mid_shape, i_shape)]
    params = {}
    for idx, (fan_in, fan_out) in enumerate(dims, start=1):
        key, kw, kb = jax.random.split(key, 3)
        bound = 1.0 / jnp.sqrt(fan_in)
        params[f"w{idx}"] = jax.random.uniform(
            kw, (fan_in, fan_out), jnp.float32, -bound, bound
        ).astype(jnp.bfloat16)
        params[f"b{idx}"] = jax.random.uniform(
            kb, (1, fan_out), jnp.float32, -bound, bound)
    return params


def _ref_forward(s, p, params):
    """Pure-JAX reference mirroring the kernel's dtype chain (bf16 matmul
    operands, f32 accumulation/bias/relu, eval-mode dropout)."""
    z_dim = s.shape[1]
    w1 = params["w1"].astype(jnp.bfloat16)
    w2 = params["w2"].astype(jnp.bfloat16)
    w3 = params["w3"].astype(jnp.bfloat16)
    w4 = params["w4"].astype(jnp.bfloat16)
    h = (jnp.dot(s.astype(jnp.bfloat16), w1[:z_dim],
                 preferred_element_type=jnp.float32)
         + jnp.dot(p.astype(jnp.bfloat16), w1[z_dim:],
                   preferred_element_type=jnp.float32)
         + params["b1"])
    h = jnp.maximum(h, 0.0)
    h = jnp.dot(h.astype(jnp.bfloat16), w2,
                preferred_element_type=jnp.float32) + params["b2"]
    h = jnp.maximum(h, 0.0)
    h = jnp.dot(h.astype(jnp.bfloat16), w3,
                preferred_element_type=jnp.float32) + params["b3"]
    h = jnp.maximum(h, 0.0)
    h = jnp.dot(h.astype(jnp.bfloat16), w4,
                preferred_element_type=jnp.float32) + params["b4"]
    return h


if __name__ == "__main__":
    # Small shapes consistent with the module's forward. B=24 exercises the
    # multi-tile path (two grid steps, one partial) at the demo scale.
    B, z_dim, c_dim, mid_shape, i_shape = 24, 24, 8, 128, 64
    drop_p = 0.2  # unused in eval mode

    key = jax.random.PRNGKey(0)
    key, ks, kp = jax.random.split(key, 3)
    s = jax.random.normal(ks, (B, z_dim), jnp.float32)
    p = jax.random.normal(kp, (B, c_dim), jnp.float32)

    params = init_params(key, z_dim, c_dim, mid_shape, i_shape)

    out = dec_model_forward(s, p, params)
    jax.block_until_ready(out)

    ref = _ref_forward(s, p, params)
    assert out.shape == (B, i_shape)
    assert jnp.allclose(out, ref, atol=5e-3, rtol=5e-3), (
        float(jnp.max(jnp.abs(out - ref))))

    print("KERNEL_OK")
</pallas_src>

<mosaic_0001>
module attributes {stable_mosaic.version = 11 : i64} {
  func.func @_dec_kernel(%arg0: i32, %arg1: memref<16x24xf32, #tpu.memory_space<vmem>>, %arg2: memref<16x8xf32, #tpu.memory_space<vmem>>, %arg3: memref<24x128xbf16, #tpu.memory_space<vmem>>, %arg4: memref<8x128xbf16, #tpu.memory_space<vmem>>, %arg5: memref<1x128xf32, #tpu.memory_space<vmem>>, %arg6: memref<128x128xbf16, #tpu.memory_space<vmem>>, %arg7: memref<1x128xf32, #tpu.memory_space<vmem>>, %arg8: memref<128x128xbf16, #tpu.memory_space<vmem>>, %arg9: memref<1x128xf32, #tpu.memory_space<vmem>>, %arg10: memref<128x64xbf16, #tpu.memory_space<vmem>>, %arg11: memref<1x64xf32, #tpu.memory_space<vmem>>, %arg12: memref<16x64xf32, #tpu.memory_space<vmem>>) attributes {dimension_semantics = [#tpu.dimension_semantics<parallel>], iteration_bounds = array<i64: 2>, scalar_prefetch = 0 : i64, scratch_operands = 0 : i64, tpu.core_type = #tpu.core_type<tc>, window_params = [{transform_indices = @transform_0, window_bounds = array<i64: 16, 24>}, {transform_indices = @transform_1, window_bounds = array<i64: 16, 8>}, {pipeline_mode = #tpu.pipeline_mode<synchronous>, transform_indices = @transform_2, window_bounds = array<i64: 24, 128>}, {pipeline_mode = #tpu.pipeline_mode<synchronous>, transform_indices = @transform_3, window_bounds = array<i64: 8, 128>}, {pipeline_mode = #tpu.pipeline_mode<synchronous>, transform_indices = @transform_4, window_bounds = array<i64: 1, 128>}, {pipeline_mode = #tpu.pipeline_mode<synchronous>, transform_indices = @transform_5, window_bounds = array<i64: 128, 128>}, {pipeline_mode = #tpu.pipeline_mode<synchronous>, transform_indices = @transform_6, window_bounds = array<i64: 1, 128>}, {pipeline_mode = #tpu.pipeline_mode<synchronous>, transform_indices = @transform_7, window_bounds = array<i64: 128, 128>}, {pipeline_mode = #tpu.pipeline_mode<synchronous>, transform_indices = @transform_8, window_bounds = array<i64: 1, 128>}, {pipeline_mode = #tpu.pipeline_mode<synchronous>, transform_indices = @transform_9, window_bounds = array<i64: 128, 64>}, {pipeline_mode = #tpu.pipeline_mode<synchronous>, transform_indices = @transform_10, window_bounds = array<i64: 1, 64>}, {transform_indices = @transform_11, window_bounds = array<i64: 16, 64>}]} {
    %c0 = arith.constant 0 : index
    %c0_0 = arith.constant 0 : index
    %0 = vector.load %arg1[%c0, %c0_0] : memref<16x24xf32, #tpu.memory_space<vmem>>, vector<16x24xf32>
    %1 = arith.truncf %0 : vector<16x24xf32> to vector<16x24xbf16>
    %c0_1 = arith.constant 0 : index
    %c0_2 = arith.constant 0 : index
    %2 = vector.load %arg2[%c0_1, %c0_2] : memref<16x8xf32, #tpu.memory_space<vmem>>, vector<16x8xf32>
    %3 = arith.truncf %2 : vector<16x8xf32> to vector<16x8xbf16>
    %c0_3 = arith.constant 0 : index
    %c0_4 = arith.constant 0 : index
    %4 = vector.load %arg3[%c0_3, %c0_4] : memref<24x128xbf16, #tpu.memory_space<vmem>>, vector<24x128xbf16>
    %cst = arith.constant dense<0.000000e+00> : vector<16x128xf32>
    %5 = tpu.matmul %1, %4, %cst {dimension_numbers = #tpu.dot_dimension_numbers<[1], [0], [0], [1], [0, 0, 1, 1], [], []>} : vector<16x24xbf16>, vector<24x128xbf16>, vector<16x128xf32> -> vector<16x128xf32>
    %c0_5 = arith.constant 0 : index
    %c0_6 = arith.constant 0 : index
    %6 = vector.load %arg4[%c0_5, %c0_6] : memref<8x128xbf16, #tpu.memory_space<vmem>>, vector<8x128xbf16>
    %cst_7 = arith.constant dense<0.000000e+00> : vector<16x128xf32>
    %7 = tpu.matmul %3, %6, %cst_7 {dimension_numbers = #tpu.dot_dimension_numbers<[1], [0], [0], [1], [0, 0, 1, 1], [], []>} : vector<16x8xbf16>, vector<8x128xbf16>, vector<16x128xf32> -> vector<16x128xf32>
    %8 = arith.addf %5, %7 : vector<16x128xf32>
    %c0_8 = arith.constant 0 : index
    %c0_9 = arith.constant 0 : index
    %9 = vector.load %arg5[%c0_8, %c0_9] : memref<1x128xf32, #tpu.memory_space<vmem>>, vector<1x128xf32>
    %10 = vector.broadcast %9 : vector<1x128xf32> to vector<16x128xf32>
    %11 = arith.addf %8, %10 : vector<16x128xf32>
    %cst_10 = arith.constant 0.000000e+00 : f32
    %12 = vector.broadcast %cst_10 : f32 to vector<16x128xf32>
    %13 = arith.maximumf %11, %12 : vector<16x128xf32>
    %14 = arith.truncf %13 : vector<16x128xf32> to vector<16x128xbf16>
    %c0_11 = arith.constant 0 : index
    %c0_12 = arith.constant 0 : index
    %15 = vector.load %arg6[%c0_11, %c0_12] : memref<128x128xbf16, #tpu.memory_space<vmem>>, vector<128x128xbf16>
    %cst_13 = arith.constant dense<0.000000e+00> : vector<16x128xf32>
    %16 = tpu.matmul %14, %15, %cst_13 {dimension_numbers = #tpu.dot_dimension_numbers<[1], [0], [0], [1], [0, 0, 1, 1], [], []>} : vector<16x128xbf16>, vector<128x128xbf16>, vector<16x128xf32> -> vector<16x128xf32>
    %c0_14 = arith.constant 0 : index
    %c0_15 = arith.constant 0 : index
    %17 = vector.load %arg7[%c0_14, %c0_15] : memref<1x128xf32, #tpu.memory_space<vmem>>, vector<1x128xf32>
    %18 = vector.broadcast %17 : vector<1x128xf32> to vector<16x128xf32>
    %19 = arith.addf %16, %18 : vector<16x128xf32>
    %cst_16 = arith.constant 0.000000e+00 : f32
    %20 = vector.broadcast %cst_16 : f32 to vector<16x128xf32>
    %21 = arith.maximumf %19, %20 : vector<16x128xf32>
    %22 = arith.truncf %21 : vector<16x128xf32> to vector<16x128xbf16>
    %c0_17 = arith.constant 0 : index
    %c0_18 = arith.constant 0 : index
    %23 = vector.load %arg8[%c0_17, %c0_18] : memref<128x128xbf16, #tpu.memory_space<vmem>>, vector<128x128xbf16>
    %cst_19 = arith.constant dense<0.000000e+00> : vector<16x128xf32>
    %24 = tpu.matmul %22, %23, %cst_19 {dimension_numbers = #tpu.dot_dimension_numbers<[1], [0], [0], [1], [0, 0, 1, 1], [], []>} : vector<16x128xbf16>, vector<128x128xbf16>, vector<16x128xf32> -> vector<16x128xf32>
    %c0_20 = arith.constant 0 : index
    %c0_21 = arith.constant 0 : index
    %25 = vector.load %arg9[%c0_20, %c0_21] : memref<1x128xf32, #tpu.memory_space<vmem>>, vector<1x128xf32>
    %26 = vector.broadcast %25 : vector<1x128xf32> to vector<16x128xf32>
    %27 = arith.addf %24, %26 : vector<16x128xf32>
    %cst_22 = arith.constant 0.000000e+00 : f32
    %28 = vector.broadcast %cst_22 : f32 to vector<16x128xf32>
    %29 = arith.maximumf %27, %28 : vector<16x128xf32>
    %30 = arith.truncf %29 : vector<16x128xf32> to vector<16x128xbf16>
    %c0_23 = arith.constant 0 : index
    %c0_24 = arith.constant 0 : index
    %31 = vector.load %arg10[%c0_23, %c0_24] : memref<128x64xbf16, #tpu.memory_space<vmem>>, vector<128x64xbf16>
    %cst_25 = arith.constant dense<0.000000e+00> : vector<16x64xf32>
    %32 = tpu.matmul %30, %31, %cst_25 {dimension_numbers = #tpu.dot_dimension_numbers<[1], [0], [0], [1], [0, 0, 1, 1], [], []>} : vector<16x128xbf16>, vector<128x64xbf16>, vector<16x64xf32> -> vector<16x64xf32>
    %c0_26 = arith.constant 0 : index
    %c0_27 = arith.constant 0 : index
    %33 = vector.load %arg11[%c0_26, %c0_27] : memref<1x64xf32, #tpu.memory_space<vmem>>, vector<1x64xf32>
    %34 = vector.broadcast %33 : vector<1x64xf32> to vector<16x64xf32>
    %35 = arith.addf %32, %34 : vector<16x64xf32>
    %c0_28 = arith.constant 0 : index
    %c0_29 = arith.constant 0 : index
    %36 = vector.load %arg12[%c0_28, %c0_29] : memref<16x64xf32, #tpu.memory_space<vmem>>, vector<16x64xf32>
    tpu.vector_store %arg12[%c0_28, %c0_29], %35 {strides = array<i32>} : memref<16x64xf32, #tpu.memory_space<vmem>>, vector<16x64xf32>,
    return
  }
  func.func @transform_0(%arg0: i32) -> (i32, i32) {
    %c0_i32 = arith.constant 0 : i32
    %c0_i32_0 = arith.constant 0 : i32
    return %arg0, %c0_i32 : i32, i32
  }
  func.func @transform_1(%arg0: i32) -> (i32, i32) {
    %c0_i32 = arith.constant 0 : i32
    %c0_i32_0 = arith.constant 0 : i32
    return %arg0, %c0_i32 : i32, i32
  }
  func.func @transform_2(%arg0: i32) -> (i32, i32) {
    %c0_i32 = arith.constant 0 : i32
    %c0_i32_0 = arith.constant 0 : i32
    %c0_i32_1 = arith.constant 0 : i32
    return %c0_i32, %c0_i32_0 : i32, i32
  }
  func.func @transform_3(%arg0: i32) -> (i32, i32) {
    %c0_i32 = arith.constant 0 : i32
    %c0_i32_0 = arith.constant 0 : i32
    %c0_i32_1 = arith.constant 0 : i32
    return %c0_i32, %c0_i32_0 : i32, i32
  }
  func.func @transform_4(%arg0: i32) -> (i32, i32) {
    %c0_i32 = arith.constant 0 : i32
    %c0_i32_0 = arith.constant 0 : i32
    %c0_i32_1 = arith.constant 0 : i32
    return %c0_i32, %c0_i32_0 : i32, i32
  }
  func.func @transform_5(%arg0: i32) -> (i32, i32) {
    %c0_i32 = arith.constant 0 : i32
    %c0_i32_0 = arith.constant 0 : i32
    %c0_i32_1 = arith.constant 0 : i32
    return %c0_i32, %c0_i32_0 : i32, i32
  }
  func.func @transform_6(%arg0: i32) -> (i32, i32) {
    %c0_i32 = arith.constant 0 : i32
    %c0_i32_0 = arith.constant 0 : i32
    %c0_i32_1 = arith.constant 0 : i32
    return %c0_i32, %c0_i32_0 : i32, i32
  }
  func.func @transform_7(%arg0: i32) -> (i32, i32) {
    %c0_i32 = arith.constant 0 : i32
    %c0_i32_0 = arith.constant 0 : i32
    %c0_i32_1 = arith.constant 0 : i32
    return %c0_i32, %c0_i32_0 : i32, i32
  }
  func.func @transform_8(%arg0: i32) -> (i32, i32) {
    %c0_i32 = arith.constant 0 : i32
    %c0_i32_0 = arith.constant 0 : i32
    %c0_i32_1 = arith.constant 0 : i32
    return %c0_i32, %c0_i32_0 : i32, i32
  }
  func.func @transform_9(%arg0: i32) -> (i32, i32) {
    %c0_i32 = arith.constant 0 : i32
    %c0_i32_0 = arith.constant 0 : i32
    %c0_i32_1 = arith.constant 0 : i32
    return %c0_i32, %c0_i32_0 : i32, i32
  }
  func.func @transform_10(%arg0: i32) -> (i32, i32) {
    %c0_i32 = arith.constant 0 : i32
    %c0_i32_0 = arith.constant 0 : i32
    %c0_i32_1 = arith.constant 0 : i32
    return %c0_i32, %c0_i32_0 : i32, i32
  }
  func.func @transform_11(%arg0: i32) -> (i32, i32) {
    %c0_i32 = arith.constant 0 : i32
    %c0_i32_0 = arith.constant 0 : i32
    return %arg0, %c0_i32 : i32, i32
  }
}

</mosaic_0001>

<llo_original>
// kernel: dec_model_forward.1
$region0: #{dec_model_forward.1}
  #allocation0 [shape = 'u32[]', space=smem, size = 0x4, offset = 0x4, fixed_abs, tag = 'smem constant byte address 0x4 - core index']
  #allocation1 [shape = 'u32[72,128]{1,0:T(1,128)}', space=vmem, size = 0x9000, scoped, tag = 'internal scratch']
  %s0 = inlined_call_operand.hbm [shape: f32[24,24], index: 0, kind: input, shape index: {}]
  %s1 = inlined_call_operand.vmem [shape: f32[24,8], index: 1, kind: input, shape index: {}]
  %s2 = inlined_call_operand.vmem [shape: bf16[24,128], index: 2, kind: input, shape index: {}]
  %s3 = inlined_call_operand.vmem [shape: bf16[8,128], index: 3, kind: input, shape index: {}]
  %s4 = inlined_call_operand.vmem [shape: f32[1,128], index: 4, kind: input, shape index: {}]
  %s5 = inlined_call_operand.vmem [shape: bf16[128,128], index: 5, kind: input, shape index: {}]
  %s6 = inlined_call_operand.vmem [shape: f32[1,128], index: 6, kind: input, shape index: {}]
  %s7 = inlined_call_operand.vmem [shape: bf16[128,128], index: 7, kind: input, shape index: {}]
  %s8 = inlined_call_operand.vmem [shape: f32[1,128], index: 8, kind: input, shape index: {}]
  %s9 = inlined_call_operand.vmem [shape: bf16[128,64], index: 9, kind: input, shape index: {}]
  %s10 = inlined_call_operand.vmem [shape: f32[1,64], index: 10, kind: input, shape index: {}]
  %s11 = inlined_call_operand.hbm [shape: f32[24,64], index: 11, kind: output, shape index: {}]
  %s12 = sld [smem:[#allocation0]]
  $region81: #{dec_model_forward.1} parent=0
    _
  %s14 = ssub.s32 1, %s12
  %s15 = scalar_select 0, %s14, %s12
  $region1: #{dec_model_forward.1} parent=0
    #allocation2 [shape = 'u8[16384]{0}', space=vmem, size = 0x4000, scoped, tag = 'input window, operand 0']
    #allocation3 [shape = 's32[2]{0}', space=sflag, size = 0x8, scoped, tag = 'scoped memory for dec_model_forward.1']
    #allocation4 [shape = 's32[2]{0}', space=sflag, size = 0x8, scoped, tag = 'scoped memory for dec_model_forward.1']
    #allocation5 [shape = 'u8[16384]{0}', space=vmem, size = 0x4000, scoped, tag = 'output window, operand 0']
    %16 = vsyncpa [#allocation3], 0
    %s17 = scalar_lea.sflag [#allocation3], 1
    %18 = vsyncpa %s17, 0
    %19 = vsyncpa [#allocation4], 0
    %s20 = scalar_lea.sflag [#allocation4], 1
    %21 = vsyncpa %s20, 0
    loop: start=0, step=1, limit=4
    $region2: #{dec_model_forward.1} parent=1 // loop_pre_header
      _
    $region3: #{dec_model_forward.1} parent=1 // loop_header
      %s23 = sphi 0, %s27
      %p24 = scmp.ge.s32.totalorder %s23, 4
      %s33 = sphi 0, %s35
      %s36 = sphi 0, %s33
      %s37 = sphi 0, %s36
      %s53 = sphi 0, %s37
      %s59 = sphi 0, %s61
      %s62 = sphi 0, %s59
      %s63 = sphi 0, %s62
      %s79 = sphi 0, %s63
      %s83 = sphi 0, %s83
      %s85 = sphi 0, %s83
      %s86 = sphi 0, %s85
      %s100 = sphi 0, %s86
      %s104 = sphi 0, %s104
      %s106 = sphi 0, %s104
      %s107 = sphi 0, %s106
      %s121 = sphi 0, %s107
      %s125 = sphi 0, %s125
      %s127 = sphi 0, %s125
      %s128 = sphi 0, %s127
      %s142 = sphi 0, %s128
      %s146 = sphi 0, %s146
      %s148 = sphi 0, %s146
      %s149 = sphi 0, %s148
      %s163 = sphi 0, %s149
      %s167 = sphi 0, %s167
      %s169 = sphi 0, %s167
      %s170 = sphi 0, %s169
      %s184 = sphi 0, %s170
      %s188 = sphi 0, %s188
      %s190 = sphi 0, %s188
      %s191 = sphi 0, %s190
      %s205 = sphi 0, %s191
      %s209 = sphi 0, %s209
      %s211 = sphi 0, %s209
      %s212 = sphi 0, %s211
      %s226 = sphi 0, %s212
      %s230 = sphi 0, %s230
      %s232 = sphi 0, %s230
      %s233 = sphi 0, %s232
      %s247 = sphi 0, %s233
      %s251 = sphi 0, %s251
      %s253 = sphi 0, %s251
      %s254 = sphi 0, %s253
      %s268 = sphi 0, %s254
      %s274 = sphi 0, %s276
      %s277 = sphi 0, %s274
      %s278 = sphi 0, %s277
      %s294 = sphi 0, %s278
    $region4: #{dec_model_forward.1} parent=1 // loop_header_branch
      %26 = sbr.rel (%p24) target = $region8
    $region5: #{dec_model_forward.1} parent=1 // loop_body
      %s28 = ssub.s32 %s23, 1
      %s29 = ssub.s32 %s23, 2
      %s30 = sadd.s32 %s23, 1
      %s31 = ssub.s32 %s23, %s30
      %p32 = scmp.eq.s32.totalorder %s31, 0
      %s34 = sadd.s32 %s33, 1
      %s35 = scalar_select %p32, %s33, %s34
      %p38 = pneg %p32
      %p39 = scmp.eq.s32.totalorder %s23, 1
      %p40 = por %p38, %p39
      %p41 = scmp.ne.s32.totalorder %s33, %s36
      %p42 = scmp.eq.s32.totalorder %s23, 0
      %p43 = por %p41, %p42
      %p44 = scmp.ne.s32.totalorder %s33, %s36
      %p45 = scmp.eq.s32.totalorder %s28, 1
      %p46 = por %p44, %p45
      %p47 = scmp.ne.s32.totalorder %s36, %s37
      %p48 = scmp.eq.s32.totalorder %s28, 0
      %p49 = por %p47, %p48
      %p50 = scmp.ne.s32.totalorder %s36, %s37
      %p51 = scmp.eq.s32.totalorder %s29, 1
      %p52 = por %p50, %p51
      %p54 = scmp.ne.s32.totalorder %s37, %s53
      %p55 = scmp.eq.s32.totalorder %s29, 0
      %p56 = por %p54, %p55
      %s57 = ssub.s32 %s23, %s30
      %p58 = scmp.eq.s32.totalorder %s57, 0
      %s60 = sadd.s32 %s59, 1
      %s61 = scalar_select %p58, %s59, %s60
      %p64 = pneg %p58
      %p65 = scmp.eq.s32.totalorder %s23, 1
      %p66 = por %p64, %p65
      %p67 = scmp.ne.s32.totalorder %s59, %s62
      %p68 = scmp.eq.s32.totalorder %s23, 0
      %p69 = por %p67, %p68
      %p70 = scmp.ne.s32.totalorder %s59, %s62
      %p71 = scmp.eq.s32.totalorder %s28, 1
      %p72 = por %p70, %p71
      %p73 = scmp.ne.s32.totalorder %s62, %s63
      %p74 = scmp.eq.s32.totalorder %s28, 0
      %p75 = por %p73, %p74
      %p76 = scmp.ne.s32.totalorder %s62, %s63
      %p77 = scmp.eq.s32.totalorder %s29, 1
      %p78 = por %p76, %p77
      %p80 = scmp.ne.s32.totalorder %s63, %s79
      %p81 = scmp.eq.s32.totalorder %s29, 0
      %p82 = por %p80, %p81
      %s84 = sadd.s32 %s83, 1
      %p87 = scmp.eq.s32.totalorder %s23, 1
      %p88 = scmp.ne.s32.totalorder %s83, %s85
      %p89 = scmp.eq.s32.totalorder %s23, 0
      %p90 = por %p88, %p89
      %p91 = scmp.ne.s32.totalorder %s83, %s85
      %p92 = scmp.eq.s32.totalorder %s28, 1
      %p93 = por %p91, %p92
      %p94 = scmp.ne.s32.totalorder %s85, %s86
      %p95 = scmp.eq.s32.totalorder %s28, 0
      %p96 = por %p94, %p95
      %p97 = scmp.ne.s32.totalorder %s85, %s86
      %p98 = scmp.eq.s32.totalorder %s29, 1
      %p99 = por %p97, %p98
      %p101 = scmp.ne.s32.totalorder %s86, %s100
      %p102 = scmp.eq.s32.totalorder %s29, 0
      %p103 = por %p101, %p102
      %s105 = sadd.s32 %s104, 1
      %p108 = scmp.eq.s32.totalorder %s23, 1
      %p109 = scmp.ne.s32.totalorder %s104, %s106
      %p110 = scmp.eq.s32.totalorder %s23, 0
      %p111 = por %p109, %p110
      %p112 = scmp.ne.s32.totalorder %s104, %s106
      %p113 = scmp.eq.s32.totalorder %s28, 1
      %p114 = por %p112, %p113
      %p115 = scmp.ne.s32.totalorder %s106, %s107
      %p116 = scmp.eq.s32.totalorder %s28, 0
      %p117 = por %p115, %p116
      %p118 = scmp.ne.s32.totalorder %s106, %s107
      %p119 = scmp.eq.s32.totalorder %s29, 1
      %p120 = por %p118, %p119
      %p122 = scmp.ne.s32.totalorder %s107, %s121
      %p123 = scmp.eq.s32.totalorder %s29, 0
      %p124 = por %p122, %p123
      %s126 = sadd.s32 %s125, 1
      %p129 = scmp.eq.s32.totalorder %s23, 1
      %p130 = scmp.ne.s32.totalorder %s125, %s127
      %p131 = scmp.eq.s32.totalorder %s23, 0
      %p132 = por %p130, %p131
      %p133 = scmp.ne.s32.totalorder %s125, %s127
      %p134 = scmp.eq.s32.totalorder %s28, 1
      %p135 = por %p133, %p134
      %p136 = scmp.ne.s32.totalorder %s127, %s128
      %p137 = scmp.eq.s32.totalorder %s28, 0
      %p138 = por %p136, %p137
      %p139 = scmp.ne.s32.totalorder %s127, %s128
      %p140 = scmp.eq.s32.totalorder %s29, 1
      %p141 = por %p139, %p140
      %p143 = scmp.ne.s32.totalorder %s128, %s142
      %p144 = scmp.eq.s32.totalorder %s29, 0
      %p145 = por %p143, %p144
      %s147 = sadd.s32 %s146, 1
      %p150 = scmp.eq.s32.totalorder %s23, 1
      %p151 = scmp.ne.s32.totalorder %s146, %s148
      %p152 = scmp.eq.s32.totalorder %s23, 0
      %p153 = por %p151, %p152
      %p154 = scmp.ne.s32.totalorder %s146, %s148
      %p155 = scmp.eq.s32.totalorder %s28, 1
      %p156 = por %p154, %p155
      %p157 = scmp.ne.s32.totalorder %s148, %s149
      %p158 = scmp.eq.s32.totalorder %s28, 0
      %p159 = por %p157, %p158
      %p160 = scmp.ne.s32.totalorder %s148, %s149
      %p161 = scmp.eq.s32.totalorder %s29, 1
      %p162 = por %p160, %p161
      %p164 = scmp.ne.s32.totalorder %s149, %s163
      %p165 = scmp.eq.s32.totalorder %s29, 0
      %p166 = por %p164, %p165
      %s168 = sadd.s32 %s167, 1
      %p171 = scmp.eq.s32.totalorder %s23, 1
      %p172 = scmp.ne.s32.totalorder %s167, %s169
      %p173 = scmp.eq.s32.totalorder %s23, 0
      %p174 = por %p172, %p173
      %p175 = scmp.ne.s32.totalorder %s167, %s169
      %p176 = scmp.eq.s32.totalorder %s28, 1
      %p177 = por %p175, %p176
      %p178 = scmp.ne.s32.totalorder %s169, %s170
      %p179 = scmp.eq.s32.totalorder %s28, 0
      %p180 = por %p178, %p179
      %p181 = scmp.ne.s32.totalorder %s169, %s170
      %p182 = scmp.eq.s32.totalorder %s29, 1
      %p183 = por %p181, %p182
      %p185 = scmp.ne.s32.totalorder %s170, %s184
      %p186 = scmp.eq.s32.totalorder %s29, 0
      %p187 = por %p185, %p186
      %s189 = sadd.s32 %s188, 1
      %p192 = scmp.eq.s32.totalorder %s23, 1
      %p193 = scmp.ne.s32.totalorder %s188, %s190
      %p194 = scmp.eq.s32.totalorder %s23, 0
      %p195 = por %p193, %p194
      %p196 = scmp.ne.s32.totalorder %s188, %s190
      %p197 = scmp.eq.s32.totalorder %s28, 1
      %p198 = por %p196, %p197
      %p199 = scmp.ne.s32.totalorder %s190, %s191
      %p200 = scmp.eq.s32.totalorder %s28, 0
      %p201 = por %p199, %p200
      %p202 = scmp.ne.s32.totalorder %s190, %s191
      %p203 = scmp.eq.s32.totalorder %s29, 1
      %p204 = por %p202, %p203
      %p206 = scmp.ne.s32.totalorder %s191, %s205
      %p207 = scmp.eq.s32.totalorder %s29, 0
      %p208 = por %p206, %p207
      %s210 = sadd.s32 %s209, 1
      %p213 = scmp.eq.s32.totalorder %s23, 1
      %p214 = scmp.ne.s32.totalorder %s209, %s211
      %p215 = scmp.eq.s32.totalorder %s23, 0
      %p216 = por %p214, %p215
      %p217 = scmp.ne.s32.totalorder %s209, %s211
      %p218 = scmp.eq.s32.totalorder %s28, 1
      %p219 = por %p217, %p218
      %p220 = scmp.ne.s32.totalorder %s211, %s212
      %p221 = scmp.eq.s32.totalorder %s28, 0
      %p222 = por %p220, %p221
      %p223 = scmp.ne.s32.totalorder %s211, %s212
      %p224 = scmp.eq.s32.totalorder %s29, 1
      %p225 = por %p223, %p224
      %p227 = scmp.ne.s32.totalorder %s212, %s226
      %p228 = scmp.eq.s32.totalorder %s29, 0
      %p229 = por %p227, %p228
      %s231 = sadd.s32 %s230, 1
      %p234 = scmp.eq.s32.totalorder %s23, 1
      %p235 = scmp.ne.s32.totalorder %s230, %s232
      %p236 = scmp.eq.s32.totalorder %s23, 0
      %p237 = por %p235, %p236
      %p238 = scmp.ne.s32.totalorder %s230, %s232
      %p239 = scmp.eq.s32.totalorder %s28, 1
      %p240 = por %p238, %p239
      %p241 = scmp.ne.s32.totalorder %s232, %s233
      %p242 = scmp.eq.s32.totalorder %s28, 0
      %p243 = por %p241, %p242
      %p244 = scmp.ne.s32.totalorder %s232, %s233
      %p245 = scmp.eq.s32.totalorder %s29, 1
      %p246 = por %p244, %p245
      %p248 = scmp.ne.s32.totalorder %s233, %s247
      %p249 = scmp.eq.s32.totalorder %s29, 0
      %p250 = por %p248, %p249
      %s252 = sadd.s32 %s251, 1
      %p255 = scmp.eq.s32.totalorder %s23, 1
      %p256 = scmp.ne.s32.totalorder %s251, %s253
      %p257 = scmp.eq.s32.totalorder %s23, 0
      %p258 = por %p256, %p257
      %p259 = scmp.ne.s32.totalorder %s251, %s253
      %p260 = scmp.eq.s32.totalorder %s28, 1
      %p261 = por %p259, %p260
      %p262 = scmp.ne.s32.totalorder %s253, %s254
      %p263 = scmp.eq.s32.totalorder %s28, 0
      %p264 = por %p262, %p263
      %p265 = scmp.ne.s32.totalorder %s253, %s254
      %p266 = scmp.eq.s32.totalorder %s29, 1
      %p267 = por %p265, %p266
      %p269 = scmp.ne.s32.totalorder %s254, %s268
      %p270 = scmp.eq.s32.totalorder %s29, 0
      %p271 = por %p269, %p270
      %s272 = ssub.s32 %s23, %s30
      %p273 = scmp.eq.s32.totalorder %s272, 0
      %s275 = sadd.s32 %s274, 1
      %s276 = scalar_select %p273, %s274, %s275
      %p279 = pneg %p273
      %p280 = scmp.eq.s32.totalorder %s23, 1
      %p281 = por %p279, %p280
      %p282 = scmp.ne.s32.totalorder %s274, %s277
      %p283 = scmp.eq.s32.totalorder %s23, 0
      %p284 = por %p282, %p283
      %p285 = scmp.ne.s32.totalorder %s274, %s277
      %p286 = scmp.eq.s32.totalorder %s28, 1
      %p287 = por %p285, %p286
      %p288 = scmp.ne.s32.totalorder %s277, %s278
      %p289 = scmp.eq.s32.totalorder %s28, 0
      %p290 = por %p288, %p289
      %p291 = scmp.ne.s32.totalorder %s277, %s278
      %p292 = scmp.eq.s32.totalorder %s29, 1
      %p293 = por %p291, %p292
      %p295 = scmp.ne.s32.totalorder %s278, %s294
      %p296 = scmp.eq.s32.totalorder %s29, 0
      %p297 = por %p295, %p296
      %p298 = scmp.le.s32.totalorder 1, %s23
      %p299 = scmp.lt.s32.totalorder %s23, 3
      %p300 = pnand %p298, %p299
      %p301 = pneg %p300
      // Predicated region
      $region9: #{dec_model_forward.1} parent=5 // pred_check
        _
      $region10: #{dec_model_forward.1} parent=5 // pred_check_branch
        %303 = sbr.rel (%p300) target = $region12
      $region11: #{dec_model_forward.1} parent=5 // pred_region
        %s304 = ssub.s32 %s23, 1
        // Predicated region
        $region13: #{dec_model_forward.1} parent=11 // pred_check
          %p305 = pneg %p96
        $region14: #{dec_model_forward.1} parent=11 // pred_check_branch
          %307 = sbr.rel (%p305) target = $region16
        $region15: #{dec_model_forward.1} parent=11 // pred_region
          _
        $region16: #{dec_model_forward.1} parent=11 // pred_fallthru
          _
        // Predicated region
        $region17: #{dec_model_forward.1} parent=11 // pred_check
          %p308 = pneg %p117
        $region18: #{dec_model_forward.1} parent=11 // pred_check_branch
          %310 = sbr.rel (%p308) target = $region20
        $region19: #{dec_model_forward.1} parent=11 // pred_region
          _
        $region20: #{dec_model_forward.1} parent=11 // pred_fallthru
          _
        // Predicated region
        $region21: #{dec_model_forward.1} parent=11 // pred_check
          %p311 = pneg %p138
        $region22: #{dec_model_forward.1} parent=11 // pred_check_branch
          %313 = sbr.rel (%p311) target = $region24
        $region23: #{dec_model_forward.1} parent=11 // pred_region
          _
        $region24: #{dec_model_forward.1} parent=11 // pred_fallthru
          _
        // Predicated region
        $region25: #{dec_model_forward.1} parent=11 // pred_check
          %p314 = pneg %p159
        $region26: #{dec_model_forward.1} parent=11 // pred_check_branch
          %316 = sbr.rel (%p314) target = $region28
        $region27: #{dec_model_forward.1} parent=11 // pred_region
          _
        $region28: #{dec_model_forward.1} parent=11 // pred_fallthru
          _
        // Predicated region
        $region29: #{dec_model_forward.1} parent=11 // pred_check
          %p317 = pneg %p180
        $region30: #{dec_model_forward.1} parent=11 // pred_check_branch
          %319 = sbr.rel (%p317) target = $region32
        $region31: #{dec_model_forward.1} parent=11 // pred_region
          _
        $region32: #{dec_model_forward.1} parent=11 // pred_fallthru
          _
        // Predicated region
        $region33: #{dec_model_forward.1} parent=11 // pred_check
          %p320 = pneg %p201
        $region34: #{dec_model_forward.1} parent=11 // pred_check_branch
          %322 = sbr.rel (%p320) target = $region36
        $region35: #{dec_model_forward.1} parent=11 // pred_region
          _
        $region36: #{dec_model_forward.1} parent=11 // pred_fallthru
          _
        // Predicated region
        $region37: #{dec_model_forward.1} parent=11 // pred_check
          %p323 = pneg %p222
        $region38: #{dec_model_forward.1} parent=11 // pred_check_branch
          %325 = sbr.rel (%p323) target = $region40
        $region39: #{dec_model_forward.1} parent=11 // pred_region
          _
        $region40: #{dec_model_forward.1} parent=11 // pred_fallthru
          _
        // Predicated region
        $region41: #{dec_model_forward.1} parent=11 // pred_check
          %p326 = pneg %p243
        $region42: #{dec_model_forward.1} parent=11 // pred_check_branch
          %328 = sbr.rel (%p326) target = $region44
        $region43: #{dec_model_forward.1} parent=11 // pred_region
          _
        $region44: #{dec_model_forward.1} parent=11 // pred_fallthru
          _
        // Predicated region
        $region45: #{dec_model_forward.1} parent=11 // pred_check
          %p329 = pneg %p264
        $region46: #{dec_model_forward.1} parent=11 // pred_check_branch
          %331 = sbr.rel (%p329) target = $region48
        $region47: #{dec_model_forward.1} parent=11 // pred_region
          _
        $region48: #{dec_model_forward.1} parent=11 // pred_fallthru
          _
      $region12: #{dec_model_forward.1} parent=5 // pred_fallthru
        _
      %p332 = scmp.lt.s32.totalorder %s23, 2
      // Predicated region
      $region49: #{dec_model_forward.1} parent=5 // pred_check
        %p333 = pneg %p332
      $region50: #{dec_model_forward.1} parent=5 // pred_check_branch
        %335 = sbr.rel (%p333) target = $region52
      $region51: #{dec_model_forward.1} parent=5 // pred_region
        // Predicated region
        $region53: #{dec_model_forward.1} parent=51 // pred_check
          %p336 = pneg %p43
        $region54: #{dec_model_forward.1} parent=51 // pred_check_branch
          %338 = sbr.rel (%p336) target = $region56
        $region55: #{dec_model_forward.1} parent=51 // pred_region
          %s339 = sand.u32 %s33, 1
          %s340 = scalar_lea.sflag [#allocation3], %s339
          %s341 = sand.u32 %s33, 1
          %s342 = smul.addr %s341, 16
          %s343 = scalar_lea.vmem [#allocation2], %s342
          %s344 = smul.u32 2, %s23
          %s345 = ssub.s32 3, %s344
          %p346 = scmp.lt.s32.totalorder %s345, 2
          %s347 = scalar_select %p346, %s345, 2
          %s348 = smul.u32 8, %s347
          %s349 = ssub.s32 16, %s348
          %s350 = sshll.u32 %s349, 4
          %351 = vsyncadd %s340, %s350
          %p352 = scmp.ne.s32.totalorder 0, %s348
          %s353 = smul.addr %s344, 8
          %s354 = scalar_lea.hbm %s0, %s353
          %s355 = smul.u32 8, %s347
          %s356 = sshll.u32 %s354, 4
          %s357 = int_to_ptr.hbm [resolvable:$true] %s356
          %s358 = sshll.u32 %s343, 4
          %s359 = int_to_ptr.vmem [resolvable:$true] %s358
          %s360 = sshll.u32 %s355, 4
          %364 = dma.hbm_to_vmem [thread:$0]  (%p352), %s357, %s360, %s359, %s340, 128, 128, 8
        $region56: #{dec_model_forward.1} parent=51 // pred_fallthru
          _
        // Predicated region
        $region57: #{dec_model_forward.1} parent=51 // pred_check
          %p365 = pneg %p69
        $region58: #{dec_model_forward.1} parent=51 // pred_check_branch
          %367 = sbr.rel (%p365) target = $region60
        $region59: #{dec_model_forward.1} parent=51 // pred_region
          %s368 = smul.u32 2, %s23
          %s369 = ssub.s32 3, %s368
          %p370 = scmp.lt.s32.totalorder %s369, 2
          %s371 = scalar_select %p370, %s369, 2
          %s372 = smul.u32 8, %s371
          %p373 = scmp.lt.s32.totalorder %s368, 2
          %s374 = scalar_select %p373, %s368, 2
          %s375 = smul.addr %s374, 8
          %s376 = scalar_lea.vmem %s1, %s375
          %s377 = smul.u32 2, %s23
          %s378 = ssub.s32 3, %s377
          %p379 = scmp.lt.s32.totalorder %s378, 2
          %s380 = scalar_select %p379, %s378, 2
          %s381 = smul.u32 8, %s380
        $region60: #{dec_model_forward.1} parent=51 // pred_fallthru
          _
      $region52: #{dec_model_forward.1} parent=5 // pred_fallthru
        _
      %p382 = scmp.le.s32.totalorder 1, %s23
      %p383 = scmp.lt.s32.totalorder %s23, 3
      %p384 = pnand %p382, %p383
      %p385 = pneg %p384
      // Predicated region
      $region61: #{dec_model_forward.1} parent=5 // pred_check
        _
      $region62: #{dec_model_forward.1} parent=5 // pred_check_branch
        %387 = sbr.rel (%p384) target = $region64
      $region63: #{dec_model_forward.1} parent=5 // pred_region
        %s388 = ssub.s32 %s23, 1
        %s389 = sand.u32 %s36, 1
        %s390 = scalar_lea.sflag [#allocation3], %s389
        %s391 = sand.u32 %s36, 1
        %s392 = smul.addr %s391, 16
        %s393 = scalar_lea.vmem [#allocation2], %s392
        // Predicated region
        $region65: #{dec_model_forward.1} parent=63 // pred_check
          %p394 = pneg %p49
        $region66: #{dec_model_forward.1} parent=63 // pred_check_branch
          %396 = sbr.rel (%p394) target = $region68
        $region67: #{dec_model_forward.1} parent=63 // pred_region
          %398 = dma.done %s390, 256
        $region68: #{dec_model_forward.1} parent=63 // pred_fallthru
          _
        %s399 = sand.u32 %s36, 1
        %s400 = scalar_lea.sflag [#allocation3], %s399
        %s401 = sand.u32 %s36, 1
        %s402 = smul.addr %s401, 16
        %s403 = scalar_lea.vmem [#allocation2], %s402
        %p404 = pneg %p49
        %p405 = pneg %p46
        %s406 = smul.u32 2, %s28
        %s407 = ssub.s32 3, %s406
        %p408 = scmp.lt.s32.totalorder %s407, 2
        %s409 = scalar_select %p408, %s407, 2
        %s410 = smul.u32 8, %s409
        %p411 = scmp.lt.s32.totalorder %s406, 2
        %s412 = scalar_select %p411, %s406, 2
        %s413 = smul.addr %s412, 8
        %s414 = scalar_lea.vmem %s1, %s413
        %p415 = pneg %p75
        %p416 = pneg %p72
        %p417 = pneg %p96
        %p418 = pneg %p93
        %p419 = pneg %p117
        %p420 = pneg %p114
        %p421 = pneg %p138
        %p422 = pneg %p135
        %p423 = pneg %p159
        %p424 = pneg %p156
        %p425 = pneg %p180
        %p426 = pneg %p177
        %p427 = pneg %p201
        %p428 = pneg %p198
        %p429 = pneg %p222
        %p430 = pneg %p219
        %p431 = pneg %p243
        %p432 = pneg %p240
        %p433 = pneg %p264
        %p434 = pneg %p261
        %p435 = pneg %p290
        %p436 = pneg %p287
        %s437 = sand.u32 %s277, 1
        %s438 = scalar_lea.sflag [#allocation4], %s437
        %s439 = sand.u32 %s277, 1
        %s440 = smul.addr %s439, 16
        %s441 = scalar_lea.vmem [#allocation5], %s440
        %s442 = smul.u32 2, %s28
        %s443 = ssub.s32 3, %s442
        %p444 = scmp.lt.s32.totalorder %s443, 2
        %s445 = scalar_select %p444, %s443, 2
        %s446 = smul.u32 8, %s445
        %s447 = smul.u32 2, %s28
        %s448 = ssub.s32 3, %s447
        %p449 = scmp.lt.s32.totalorder %s448, 2
        %s450 = scalar_select %p449, %s448, 2
        %s451 = smul.u32 8, %s450
        %p452 = scmp.lt.s32.totalorder %s447, 2
        %s453 = scalar_select %p452, %s447, 2
        %s454 = smul.addr %s453, 8
        %s455 = scalar_lea.vmem %s1, %s454
        %s456 = smul.u32 2, %s28
        %s457 = ssub.s32 3, %s456
        %p458 = scmp.lt.s32.totalorder %s457, 2
        %s459 = scalar_select %p458, %s457, 2
        %s460 = smul.u32 8, %s459
        %s461 = smul.u32 2, %s28
        %s462 = ssub.s32 3, %s461
        %p463 = scmp.lt.s32.totalorder %s462, 2
        %s464 = scalar_select %p463, %s462, 2
        %s465 = smul.u32 8, %s464
        %v467 = vld [vmem:[%s393] sm:$0xff]
        %v468 = vld [vmem:[%s393 + $0x8] sm:$0xff]
        %v469 = vpack.c.bf16 %v468, %v467
        %v470 = vld [vmem:[%s455] sm:$0xff]
        %v471 = vld [vmem:[%s455 + $0x8] sm:$0xff]
        %v472 = vpack.c.bf16 %v471, %v470
        %v473 = vld [vmem:[%s2] sm:$0xf]
        %v474 = vld [vmem:[%s2 + $0x4] sm:$0xf]
        %v475 = vld [vmem:[%s2 + $0x8] sm:$0xf]
        %v476 = vld [vmem:[%s3] sm:$0xf]
        %vm477 = vcmask 64512
        %v479 = vsel %vm477, %v472, 0
        %vm481 = vcmask 1043456
        %v483 = vsel %vm481, %v476, 0
        %485 = vmatpush.bf16.msra.mxu0 0
        %486 = vmatpush.bf16.msra.mxu0 0
        %487 = vmatpush.bf16.msra.mxu0 0
        %488 = vmatpush.bf16.msra.mxu0 0
        %489 = vmatpush.bf16.msra.mxu0 0
        %490 = vmatpush.bf16.msra.mxu0 0
        %491 = vmatpush.bf16.msra.mxu0 0
        %492 = vmatpush.bf16.msra.mxu0 %v483
        %493 = vmatmul.bf16.gmra.mxu0 %v479
        %v494 = vpop.f32.mrf.mxu0
        %v495 = vadd.f32 0.0, %v494
        %v496 = vpop.f32.mrf.mxu0
        %v497 = vadd.f32 0.0, %v496
        %498 = vdwg.mxu0
        %v502 = vunpack.c.l.b16 %v473
        %v503 = vunpack.c.l.b16 %v474
        %v504 = vunpack.c.l.b16 %v475
        %v505 = vpack.c.b16 %v503, %v502
        %v506 = vpack.c.b16 %v504, %v504
        %vm508 = vcmask 195584
        %v510 = vsel %vm508, %v469, 0
        %v513 = vsel %vm481, %v506, 0
        %515 = vmatpush.bf16.msra.mxu0 0
        %516 = vmatpush.bf16.msra.mxu0 0
        %517 = vmatpush.bf16.msra.mxu0 0
        %518 = vmatpush.bf16.msra.mxu0 0
        %519 = vmatpush.bf16.msra.mxu0 0
        %520 = vmatpush.bf16.msra.mxu0 0
        %521 = vmatpush.bf16.msra.mxu0 %v513
        %522 = vmatpush.bf16.msra.mxu0 %v505
        %523 = vmatmul.bf16.gmra.mxu0 %v510
        %v524 = vpop.f32.mrf.mxu0
        %v525 = vadd.f32 %v495, %v524
        %v526 = vpop.f32.mrf.mxu0
        %v527 = vadd.f32 %v497, %v526
        %528 = vdwg.mxu0
        %v529 = vld [vmem:[%s4] sm:$0x1]
        %v531 = vperm.slane %v529, 0
        %v533 = vadd.f32 %v525, %v531
        %v534 = vadd.f32 %v527, %v531
        %v535 = vmax.f32 %v533, 0.0
        %v536 = vmax.f32 %v534, 0.0
        %v537 = vpack.c.bf16 %v536, %v535
        %v538 = vld [vmem:[%s5] sm:$0xf]
        %v539 = vld [vmem:[%s5 + $0x4] sm:$0xf]
        %v540 = vld [vmem:[%s5 + $0x8] sm:$0xf]
        %v541 = vld [vmem:[%s5 + $0xc] sm:$0xf]
        %v542 = vld [vmem:[%s5 + $0x10] sm:$0xf]
        %v543 = vld [vmem:[%s5 + $0x14] sm:$0xf]
        %v544 = vld [vmem:[%s5 + $0x18] sm:$0xf]
        %v545 = vld [vmem:[%s5 + $0x1c] sm:$0xf]
        %v546 = vld [vmem:[%s5 + $0x20] sm:$0xf]
        %v547 = vld [vmem:[%s5 + $0x24] sm:$0xf]
        %v548 = vld [vmem:[%s5 + $0x28] sm:$0xf]
        %v549 = vld [vmem:[%s5 + $0x2c] sm:$0xf]
        %v550 = vld [vmem:[%s5 + $0x30] sm:$0xf]
        %v551 = vld [vmem:[%s5 + $0x34] sm:$0xf]
        %v552 = vld [vmem:[%s5 + $0x38] sm:$0xf]
        %v553 = vld [vmem:[%s5 + $0x3c] sm:$0xf]
        %v554 = vld [vmem:[%s6] sm:$0x1]
        %v556 = vperm.slane %v554, 0
        %v574 = vunpack.c.l.b16 %v538
        %v575 = vunpack.c.l.b16 %v539
        %v576 = vunpack.c.l.b16 %v540
        %v577 = vunpack.c.l.b16 %v541
        %v578 = vunpack.c.l.b16 %v542
        %v579 = vunpack.c.l.b16 %v543
        %v580 = vunpack.c.l.b16 %v544
        %v581 = vunpack.c.l.b16 %v545
        %v582 = vunpack.c.l.b16 %v546
        %v583 = vunpack.c.l.b16 %v547
        %v584 = vunpack.c.l.b16 %v548
        %v585 = vunpack.c.l.b16 %v549
        %v586 = vunpack.c.l.b16 %v550
        %v587 = vunpack.c.l.b16 %v551
        %v588 = vunpack.c.l.b16 %v552
        %v589 = vunpack.c.l.b16 %v553
        %v590 = vpack.c.b16 %v575, %v574
        %v591 = vpack.c.b16 %v577, %v576
        %v592 = vpack.c.b16 %v579, %v578
        %v593 = vpack.c.b16 %v581, %v580
        %v594 = vpack.c.b16 %v583, %v582
        %v595 = vpack.c.b16 %v585, %v584
        %v596 = vpack.c.b16 %v587, %v586
        %v597 = vpack.c.b16 %v589, %v588
        %606 = vmatpush.bf16.msra.mxu0 %v597
        %607 = vmatpush.bf16.msra.mxu0 %v596
        %608 = vmatpush.bf16.msra.mxu0 %v595
        %609 = vmatpush.bf16.msra.mxu0 %v594
        %610 = vmatpush.bf16.msra.mxu0 %v593
        %611 = vmatpush.bf16.msra.mxu0 %v592
        %612 = vmatpush.bf16.msra.mxu0 %v591
        %613 = vmatpush.bf16.msra.mxu0 %v590
        %614 = vmatmul.bf16.gmra.mxu0 %v537
        %v615 = vpop.f32.mrf.mxu0
        %v616 = vadd.f32 %v556, %v615
        %v617 = vpop.f32.mrf.mxu0
        %v618 = vadd.f32 %v556, %v617
        %619 = vdwg.mxu0
        %v620 = vmax.f32 %v616, 0.0
        %v621 = vmax.f32 %v618, 0.0
        %v622 = vpack.c.bf16 %v621, %v620
        %v623 = vld [vmem:[%s7] sm:$0xf]
        %v624 = vld [vmem:[%s7 + $0x4] sm:$0xf]
        %v625 = vld [vmem:[%s7 + $0x8] sm:$0xf]
        %v626 = vld [vmem:[%s7 + $0xc] sm:$0xf]
        %v627 = vld [vmem:[%s7 + $0x10] sm:$0xf]
        %v628 = vld [vmem:[%s7 + $0x14] sm:$0xf]
        %v629 = vld [vmem:[%s7 + $0x18] sm:$0xf]
        %v630 = vld [vmem:[%s7 + $0x1c] sm:$0xf]
        %v631 = vld [vmem:[%s7 + $0x20] sm:$0xf]
        %v632 = vld [vmem:[%s7 + $0x24] sm:$0xf]
        %v633 = vld [vmem:[%s7 + $0x28] sm:$0xf]
        %v634 = vld [vmem:[%s7 + $0x2c] sm:$0xf]
        %v635 = vld [vmem:[%s7 + $0x30] sm:$0xf]
        %v636 = vld [vmem:[%s7 + $0x34] sm:$0xf]
        %v637 = vld [vmem:[%s7 + $0x38] sm:$0xf]
        %v638 = vld [vmem:[%s7 + $0x3c] sm:$0xf]
        %v639 = vld [vmem:[%s8] sm:$0x1]
        %v641 = vperm.slane %v639, 0
        %v659 = vunpack.c.l.b16 %v623
        %v660 = vunpack.c.l.b16 %v624
        %v661 = vunpack.c.l.b16 %v625
        %v662 = vunpack.c.l.b16 %v626
        %v663 = vunpack.c.l.b16 %v627
        %v664 = vunpack.c.l.b16 %v628
        %v665 = vunpack.c.l.b16 %v629
        %v666 = vunpack.c.l.b16 %v630
        %v667 = vunpack.c.l.b16 %v631
        %v668 = vunpack.c.l.b16 %v632
        %v669 = vunpack.c.l.b16 %v633
        %v670 = vunpack.c.l.b16 %v634
        %v671 = vunpack.c.l.b16 %v635
        %v672 = vunpack.c.l.b16 %v636
        %v673 = vunpack.c.l.b16 %v637
        %v674 = vunpack.c.l.b16 %v638
        %v675 = vpack.c.b16 %v660, %v659
        %v676 = vpack.c.b16 %v662, %v661
        %v677 = vpack.c.b16 %v664, %v663
        %v678 = vpack.c.b16 %v666, %v665
        %v679 = vpack.c.b16 %v668, %v667
        %v680 = vpack.c.b16 %v670, %v669
        %v681 = vpack.c.b16 %v672, %v671
        %v682 = vpack.c.b16 %v674, %v673
        %691 = vmatpush.bf16.msra.mxu0 %v682
        %692 = vmatpush.bf16.msra.mxu0 %v681
        %693 = vmatpush.bf16.msra.mxu0 %v680
        %694 = vmatpush.bf16.msra.mxu0 %v679
        %695 = vmatpush.bf16.msra.mxu0 %v678
        %696 = vmatpush.bf16.msra.mxu0 %v677
        %697 = vmatpush.bf16.msra.mxu0 %v676
        %698 = vmatpush.bf16.msra.mxu0 %v675
        %699 = vmatmul.bf16.gmra.mxu0 %v622
        %v700 = vpop.f32.mrf.mxu0
        %v701 = vadd.f32 %v641, %v700
        %v702 = vpop.f32.mrf.mxu0
        %v703 = vadd.f32 %v641, %v702
        %704 = vdwg.mxu0
        %v705 = vmax.f32 %v701, 0.0
        %v706 = vmax.f32 %v703, 0.0
        %v707 = vpack.c.bf16 %v706, %v705
        %v708 = vld [vmem:[%s9] sm:$0xf]
        %v709 = vld [vmem:[%s9 + $0x4] sm:$0xf]
        %v710 = vld [vmem:[%s9 + $0x8] sm:$0xf]
        %v711 = vld [vmem:[%s9 + $0xc] sm:$0xf]
        %v712 = vld [vmem:[%s9 + $0x10] sm:$0xf]
        %v713 = vld [vmem:[%s9 + $0x14] sm:$0xf]
        %v714 = vld [vmem:[%s9 + $0x18] sm:$0xf]
        %v715 = vld [vmem:[%s9 + $0x1c] sm:$0xf]
        %v716 = vld [vmem:[%s9 + $0x20] sm:$0xf]
        %v717 = vld [vmem:[%s9 + $0x24] sm:$0xf]
        %v718 = vld [vmem:[%s9 + $0x28] sm:$0xf]
        %v719 = vld [vmem:[%s9 + $0x2c] sm:$0xf]
        %v720 = vld [vmem:[%s9 + $0x30] sm:$0xf]
        %v721 = vld [vmem:[%s9 + $0x34] sm:$0xf]
        %v722 = vld [vmem:[%s9 + $0x38] sm:$0xf]
        %v723 = vld [vmem:[%s9 + $0x3c] sm:$0xf]
        %v724 = vld [vmem:[%s10] sm:$0x1]
        %v726 = vperm.slane %v724, 0
        %v744 = vunpack.c.l.b16 %v708
        %v745 = vunpack.c.l.b16 %v709
        %v746 = vunpack.c.l.b16 %v710
        %v747 = vunpack.c.l.b16 %v711
        %v748 = vunpack.c.l.b16 %v712
        %v749 = vunpack.c.l.b16 %v713
        %v750 = vunpack.c.l.b16 %v714
        %v751 = vunpack.c.l.b16 %v715
        %v752 = vunpack.c.l.b16 %v716
        %v753 = vunpack.c.l.b16 %v717
        %v754 = vunpack.c.l.b16 %v718
        %v755 = vunpack.c.l.b16 %v719
        %v756 = vunpack.c.l.b16 %v720
        %v757 = vunpack.c.l.b16 %v721
        %v758 = vunpack.c.l.b16 %v722
        %v759 = vunpack.c.l.b16 %v723
        %v760 = vpack.c.b16 %v745, %v744
        %v761 = vpack.c.b16 %v747, %v746
        %v762 = vpack.c.b16 %v749, %v748
        %v763 = vpack.c.b16 %v751, %v750
        %v764 = vpack.c.b16 %v753, %v752
        %v765 = vpack.c.b16 %v755, %v754
        %v766 = vpack.c.b16 %v757, %v756
        %v767 = vpack.c.b16 %v759, %v758
        %776 = vmatpush.bf16.msra.mxu0 %v767
        %777 = vmatpush.bf16.msra.mxu0 %v766
        %778 = vmatpush.bf16.msra.mxu0 %v765
        %779 = vmatpush.bf16.msra.mxu0 %v764
        %780 = vmatpush.bf16.msra.mxu0 %v763
        %781 = vmatpush.bf16.msra.mxu0 %v762
        %782 = vmatpush.bf16.msra.mxu0 %v761
        %783 = vmatpush.bf16.msra.mxu0 %v760
        %784 = vmatmul.bf16.gmra.mxu0 %v707
        %v785 = vpop.f32.mrf.mxu0
        %v786 = vadd.f32 %v726, %v785
        %v787 = vpop.f32.mrf.mxu0
        %v788 = vadd.f32 %v726, %v787
        %789 = vdwg.mxu0
        %vm790 = vcmask 523264
        %791 = vst.msk [vmem:[%s441] sm:$0xff] %vm790, %v786
        %792 = vst.msk [vmem:[%s441 + $0x8] sm:$0xff] %vm790, %v788
        %s793 = sand.u32 %s277, 1
        %s794 = scalar_lea.sflag [#allocation4], %s793
        %s795 = sand.u32 %s277, 1
        %s796 = smul.addr %s795, 16
        %s797 = scalar_lea.vmem [#allocation5], %s796
        // Predicated region
        $region69: #{dec_model_forward.1} parent=63 // pred_check
          %p798 = pneg %p287
        $region70: #{dec_model_forward.1} parent=63 // pred_check_branch
          %800 = sbr.rel (%p798) target = $region72
        $region71: #{dec_model_forward.1} parent=63 // pred_region
          %s801 = smul.u32 2, %s28
          %s802 = ssub.s32 3, %s801
          %p803 = scmp.lt.s32.totalorder %s802, 2
          %s804 = scalar_select %p803, %s802, 2
          %s805 = smul.u32 8, %s804
          %s806 = ssub.s32 16, %s805
          %s807 = sshll.u32 %s806, 4
          %808 = vsyncadd %s794, %s807
          %p809 = scmp.ne.s32.totalorder 0, %s805
          %s810 = smul.addr %s801, 8
          %s811 = scalar_lea.hbm %s11, %s810
          %s812 = smul.u32 8, %s804
          %s813 = sshll.u32 %s797, 4
          %s814 = int_to_ptr.vmem [resolvable:$true] %s813
          %s815 = sshll.u32 %s811, 4
          %s816 = int_to_ptr.hbm [resolvable:$true] %s815
          %s817 = sshll.u32 %s812, 4
          %821 = dma.vmem_to_hbm [thread:$0]  (%p809), %s814, %s817, %s816, %s794, 128, 128, 8
        $region72: #{dec_model_forward.1} parent=63 // pred_fallthru
          _
      $region64: #{dec_model_forward.1} parent=5 // pred_fallthru
        _
      %p822 = scmp.le.s32.totalorder 2, %s23
      // Predicated region
      $region73: #{dec_model_forward.1} parent=5 // pred_check
        %p823 = pneg %p822
      $region74: #{dec_model_forward.1} parent=5 // pred_check_branch
        %825 = sbr.rel (%p823) target = $region76
      $region75: #{dec_model_forward.1} parent=5 // pred_region
        %s826 = ssub.s32 %s23, 2
        // Predicated region
        $region77: #{dec_model_forward.1} parent=75 // pred_check
          %p827 = pneg %p293
        $region78: #{dec_model_forward.1} parent=75 // pred_check_branch
          %829 = sbr.rel (%p827) target = $region80
        $region79: #{dec_model_forward.1} parent=75 // pred_region
          %s830 = sand.u32 %s278, 1
          %s831 = scalar_lea.sflag [#allocation4], %s830
          %s832 = sand.u32 %s278, 1
          %s833 = smul.addr %s832, 16
          %s834 = scalar_lea.vmem [#allocation5], %s833
          %836 = dma.done %s831, 256
        $region80: #{dec_model_forward.1} parent=75 // pred_fallthru
          _
      $region76: #{dec_model_forward.1} parent=5 // pred_fallthru
        _
    $region6: #{dec_model_forward.1} parent=1 // loop_footer
      %s27 = sadd.s32 1, %s23
    $region7: #{dec_model_forward.1} parent=1 // loop_footer_branch
      %22 = sbr.rel target = $region3
    $region8: #{dec_model_forward.1} parent=1 // loop_exit
      _
    %837 = vsyncpa [#allocation3], 1
    %s838 = scalar_lea.sflag [#allocation3], 1
    %839 = vsyncpa %s838, 1
    %840 = vsyncpa [#allocation4], 1
    %s841 = scalar_lea.sflag [#allocation4], 1
    %842 = vsyncpa %s841, 1

</llo_original>
